<compile_context>
chip_gen: v6e
topology: v6e:2x2x1
jax: 0.10.0
libtpu: 0.0.40
codegen_flags: <defaults>
</compile_context>

<pallas_src>
import math

import jax
import jax.numpy as jnp
from jax.experimental import pallas as pl
from jax.experimental.pallas import tpu as pltpu


def _scale_kernel(img_ref, s_ref, o_ref):
    # img_ref: (BLOCK_ROWS, LANE)   s_ref: (1, LANE)   o_ref: (BLOCK_ROWS, LANE)
    o_ref[...] = img_ref[...] * s_ref[...]   # sublane-broadcast multiply (VPU)


def _choose_lane(W, total, max_lane=2048):
    """Pick a lane-dense last dim: a multiple of lcm(W, 128) dividing `total`."""
    base = W if W % 128 == 0 else (W * 128) // math.gcd(W, 128)   # lcm(W, 128)
    if total % base != 0:
        # Awkward shape: keep W as the full last dim (correct, not lane-dense).
        return W, 1
    lane = base
    # Widen further while it still divides the flattened element count.
    while lane * 2 <= max_lane and total % (lane * 2) == 0:
        lane *= 2
    return lane, lane // W


def mask_forward(image, weight, pruned, *, target_block_bytes=4 << 20):
    """image: (N, C, H, W); weight: (W,) float; pruned: (W,) bool."""
    N, C, H, W = image.shape
    total = N * C * H * W
    dtype = image.dtype
    itemsize = jnp.dtype(dtype).itemsize

    # Effective scale: weight with pruned positions zeroed (tiny, done once).
    w_eff = jnp.where(pruned, jnp.zeros_like(weight), weight).astype(dtype)

    lane, repeat = _choose_lane(W, total)
    rows = total // lane
    img2d = image.reshape(rows, lane)
    scale = jnp.tile(w_eff, repeat).reshape(1, lane)

    # Row block: as large as the ~4 MiB/buffer budget allows (multiple of 8),
    # or the full row extent for small inputs.  Partial last block handled by
    # the cdiv grid.
    rows_per_block = max(8, (target_block_bytes // (lane * itemsize)) // 8 * 8)
    block_rows = rows if rows <= rows_per_block else rows_per_block
    grid = (pl.cdiv(rows, block_rows),)

    out2d = pl.pallas_call(
        _scale_kernel,
        out_shape=jax.ShapeDtypeStruct((rows, lane), dtype),
        grid_spec=pltpu.PrefetchScalarGridSpec(
            num_scalar_prefetch=0,
            grid=grid,
            in_specs=[
                pl.BlockSpec((block_rows, lane), lambda i: (i, 0)),
                pl.BlockSpec((1, lane), lambda i: (0, 0)),
            ],
            out_specs=pl.BlockSpec((block_rows, lane), lambda i: (i, 0)),
        ),
        compiler_params=pltpu.CompilerParams(
            dimension_semantics=("parallel",),
            vmem_limit_bytes=32 << 20,
        ),
    )(img2d, scale)

    return out2d.reshape(N, C, H, W)


if __name__ == "__main__":
    key = jax.random.PRNGKey(0)
    k_img, k_w, _ = jax.random.split(key, 3)

    # Small shapes consistent with the module: image NCHW, weight/pruned over W.
    N, C, H, W = 2, 4, 8, 16
    image = jax.random.normal(k_img, (N, C, H, W), dtype=jnp.float32)

    # Module init is weight = ones, pruned = zeros(bool); perturb weight and
    # prune a deterministic subset so the test is non-trivial.
    weight = jnp.ones((W,), dtype=jnp.float32) + 0.1 * jax.random.normal(
        k_w, (W,), dtype=jnp.float32
    )
    pruned = (jnp.arange(W) % 3 == 0)  # deterministic bool buffer

    out = mask_forward(image, weight, pruned)
    out = jax.block_until_ready(out)

    # Reference (plain JAX, mirrors the PyTorch forward exactly).
    mask = jnp.where(pruned, 0.0, 1.0).astype(jnp.float32)
    ref = image * (weight * mask)[None, None, None, :]
    assert out.shape == image.shape and out.dtype == image.dtype
    assert jnp.allclose(out, ref, atol=1e-6, rtol=1e-6)

    print("KERNEL_OK")
</pallas_src>

<mosaic_0001>
module attributes {stable_mosaic.version = 11 : i64} {
  func.func @_scale_kernel(%arg0: i32, %arg1: memref<1x1024xf32, #tpu.memory_space<vmem>>, %arg2: memref<1x1024xf32, #tpu.memory_space<vmem>>, %arg3: memref<1x1024xf32, #tpu.memory_space<vmem>>) attributes {dimension_semantics = [#tpu.dimension_semantics<parallel>], iteration_bounds = array<i64: 1>, scalar_prefetch = 0 : i64, scratch_operands = 0 : i64, tpu.core_type = #tpu.core_type<tc>, window_params = [{transform_indices = @transform_0, window_bounds = array<i64: 1, 1024>}, {pipeline_mode = #tpu.pipeline_mode<synchronous>, transform_indices = @transform_1, window_bounds = array<i64: 1, 1024>}, {transform_indices = @transform_2, window_bounds = array<i64: 1, 1024>}]} {
    %c0 = arith.constant 0 : index
    %c0_0 = arith.constant 0 : index
    %0 = vector.load %arg1[%c0, %c0_0] : memref<1x1024xf32, #tpu.memory_space<vmem>>, vector<1x1024xf32>
    %c0_1 = arith.constant 0 : index
    %c0_2 = arith.constant 0 : index
    %1 = vector.load %arg2[%c0_1, %c0_2] : memref<1x1024xf32, #tpu.memory_space<vmem>>, vector<1x1024xf32>
    %2 = arith.mulf %0, %1 : vector<1x1024xf32>
    %c0_3 = arith.constant 0 : index
    %c0_4 = arith.constant 0 : index
    %3 = vector.load %arg3[%c0_3, %c0_4] : memref<1x1024xf32, #tpu.memory_space<vmem>>, vector<1x1024xf32>
    tpu.vector_store %arg3[%c0_3, %c0_4], %2 {strides = array<i32>} : memref<1x1024xf32, #tpu.memory_space<vmem>>, vector<1x1024xf32>,
    return
  }
  func.func @transform_0(%arg0: i32) -> (i32, i32) {
    %c0_i32 = arith.constant 0 : i32
    %c0_i32_0 = arith.constant 0 : i32
    return %arg0, %c0_i32 : i32, i32
  }
  func.func @transform_1(%arg0: i32) -> (i32, i32) {
    %c0_i32 = arith.constant 0 : i32
    %c0_i32_0 = arith.constant 0 : i32
    %c0_i32_1 = arith.constant 0 : i32
    return %c0_i32, %c0_i32_0 : i32, i32
  }
  func.func @transform_2(%arg0: i32) -> (i32, i32) {
    %c0_i32 = arith.constant 0 : i32
    %c0_i32_0 = arith.constant 0 : i32
    return %arg0, %c0_i32 : i32, i32
  }
}

</mosaic_0001>

<llo_original>
// kernel: tpu_custom_call.1
$region0: #{tpu_custom_call.1}
  #allocation0 [shape = 'u32[]', space=smem, size = 0x4, offset = 0x4, fixed_abs, tag = 'smem constant byte address 0x4 - core index']
  #allocation1 [shape = 'u32[144,128]{1,0:T(1,128)}', space=vmem, size = 0x12000, scoped, tag = 'internal scratch']
  %s0 = inlined_call_operand.hbm [shape: f32[1,1024], index: 0, kind: input, shape index: {}]
  %s1 = inlined_call_operand.hbm [shape: f32[1,1024], index: 1, kind: input, shape index: {}]
  %s2 = inlined_call_operand.hbm [shape: f32[1,1024], index: 2, kind: output, shape index: {}]
  %s3 = sld [smem:[#allocation0]]
  $region26: #{tpu_custom_call.1} parent=0
    _
  %s5 = ssub.s32 1, %s3
  %s6 = scalar_select 0, %s5, %s3
  $region1: #{tpu_custom_call.1} parent=0
    #allocation2 [shape = 'u8[4096]{0}', space=vmem, size = 0x1000, scoped, tag = 'input window, operand 0, single buffered']
    #allocation3 [shape = 's32[1]{0}', space=sflag, size = 0x4, scoped, tag = 'scoped memory for tpu_custom_call.1']
    #allocation4 [shape = 's32[1]{0}', space=sflag, size = 0x4, scoped, tag = 'scoped memory for tpu_custom_call.1']
    #allocation5 [shape = 'u8[4096]{0}', space=vmem, size = 0x1000, scoped, tag = 'input window, operand 1, single buffered']
    #allocation6 [shape = 's32[1]{0}', space=sflag, size = 0x4, scoped, tag = 'scoped memory for tpu_custom_call.1']
    #allocation7 [shape = 'u8[4096]{0}', space=vmem, size = 0x1000, scoped, tag = 'output window, operand 0, single buffered']
    %7 = vsyncpa [#allocation3], 0
    %8 = vsyncpa [#allocation6], 0
    %9 = vsyncpa [#allocation4], 0
    // Predicated region
    $region2: #{tpu_custom_call.1} parent=1 // pred_check
      _
    $region3: #{tpu_custom_call.1} parent=1 // pred_check_branch
      %11 = sbr.rel (0) target = $region5
    $region4: #{tpu_custom_call.1} parent=1 // pred_region
      %s13 = ssub.s32 128, 128
      %14 = vsyncadd [#allocation3], %s13
      %s16 = sshll.u32 [#allocation2], 4
      %s17 = int_to_ptr.vmem [resolvable:$true] %s16
      %19 = dma.hbm_to_vmem [thread:$0]  %s0, 128, %s17, [#allocation3]
    $region5: #{tpu_custom_call.1} parent=1 // pred_fallthru
      _
    // Predicated region
    $region6: #{tpu_custom_call.1} parent=1 // pred_check
      _
    $region7: #{tpu_custom_call.1} parent=1 // pred_check_branch
      %21 = sbr.rel (0) target = $region9
    $region8: #{tpu_custom_call.1} parent=1 // pred_region
      %s23 = ssub.s32 128, 128
      %24 = vsyncadd [#allocation6], %s23
      %s26 = sshll.u32 [#allocation5], 4
      %s27 = int_to_ptr.vmem [resolvable:$true] %s26
      %29 = dma.hbm_to_vmem [thread:$0]  %s1, 128, %s27, [#allocation6]
    $region9: #{tpu_custom_call.1} parent=1 // pred_fallthru
      _
    // Predicated region
    $region10: #{tpu_custom_call.1} parent=1 // pred_check
      _
    $region11: #{tpu_custom_call.1} parent=1 // pred_check_branch
      %31 = sbr.rel (0) target = $region13
    $region12: #{tpu_custom_call.1} parent=1 // pred_region
      %32 = dma.done [#allocation3], 128
    $region13: #{tpu_custom_call.1} parent=1 // pred_fallthru
      _
    // Predicated region
    $region14: #{tpu_custom_call.1} parent=1 // pred_check
      _
    $region15: #{tpu_custom_call.1} parent=1 // pred_check_branch
      %34 = sbr.rel (0) target = $region17
    $region16: #{tpu_custom_call.1} parent=1 // pred_region
      %35 = dma.done [#allocation6], 128
    $region17: #{tpu_custom_call.1} parent=1 // pred_fallthru
      _
    %v36 = vld [vmem:[#allocation2] sm:$0xff]
    %v37 = vld [vmem:[#allocation5] sm:$0xff]
    %v38 = vmul.f32 %v36, %v37
    %39 = vst [vmem:[#allocation7] sm:$0xff] %v38
    // Predicated region
    $region18: #{tpu_custom_call.1} parent=1 // pred_check
      _
    $region19: #{tpu_custom_call.1} parent=1 // pred_check_branch
      %41 = sbr.rel (0) target = $region21
    $region20: #{tpu_custom_call.1} parent=1 // pred_region
      %s43 = ssub.s32 128, 128
      %44 = vsyncadd [#allocation4], %s43
      %s46 = sshll.u32 [#allocation7], 4
      %s47 = int_to_ptr.vmem [resolvable:$true] %s46
      %49 = dma.vmem_to_hbm [thread:$0]  %s47, 128, %s2, [#allocation4]
    $region21: #{tpu_custom_call.1} parent=1 // pred_fallthru
      _
    // Predicated region
    $region22: #{tpu_custom_call.1} parent=1 // pred_check
      _
    $region23: #{tpu_custom_call.1} parent=1 // pred_check_branch
      %51 = sbr.rel (0) target = $region25
    $region24: #{tpu_custom_call.1} parent=1 // pred_region
      %52 = dma.done [#allocation4], 128
    $region25: #{tpu_custom_call.1} parent=1 // pred_fallthru
      _
    %53 = vsyncpa [#allocation3], 1
    %54 = vsyncpa [#allocation6], 1
    %55 = vsyncpa [#allocation4], 1

</llo_original>
